<compile_context>
chip_gen: v5e
topology: v5e:2x2
jax: 0.10.0
libtpu: 0.0.40
codegen_flags: <defaults>
</compile_context>

<pallas_src>
import functools
import math

import jax
import jax.numpy as jnp
from jax.experimental import pallas as pl
from jax.experimental.pallas import tpu as pltpu


# ------------------------------- small helpers --------------------------------

def _const_spec(shape):
    nd = len(shape)
    return pl.BlockSpec(shape, lambda i, _nd=nd: (0,) * _nd)


def _softmax_lastdim(y):
    m = jnp.max(y, axis=-1, keepdims=True)
    e = jnp.exp(y - m)
    return e / jnp.sum(e, axis=-1, keepdims=True)


def _weighted_pool(g, xs):
    # sum_j g[:, j] * xs[j]  with a balanced tree reduction (no dependent add chain).
    # TODO(synk): for large expert counts switch to a stacked (TB, G, D) multiply+reduce
    # or a g @ S lane-expansion matmul to avoid the per-expert lane-broadcast slices.
    terms = [g[:, j:j + 1] * xs[j] for j in range(len(xs))]
    while len(terms) > 1:
        nxt = [terms[k] + terms[k + 1] for k in range(0, len(terms) - 1, 2)]
        if len(terms) % 2:
            nxt.append(terms[-1])
        terms = nxt
    return terms[0]


def _vmem_budget_bytes():
    try:
        cap = getattr(pltpu.get_tpu_info(), "vmem_capacity_bytes", None)
        if cap:
            return int(cap) // 2          # half of physical: 64MiB v5e/v6e, 32MiB v7x
    except Exception:
        pass
    return 32 * 1024 * 1024


def _pick_batch_tile(B, row_bytes, const_bytes, budget):
    cands = [t for t in (2048, 1024, 512, 256, 128, 64, 32, 16, 8)
             if t <= B and B % t == 0]
    if not cands:
        return B                          # tiny/odd batch: single full-size block
    fit = [t for t in cands if const_bytes + 2 * t * row_bytes <= budget] or [cands[-1]]
    for t in fit:                         # prefer >= 2 parallel tiles (v7x has 2 TCs)
        if B // t >= 2:
            return t
    return fit[0]


# ----------------------------- fused PLE kernel --------------------------------

def _ple_fused_kernel(*refs, n_task, n_es, n_esh, n_level, expert_dims, n_tower_layers):
    n_expert_layers = len(expert_dims)
    E = n_task * n_es + n_esh             # total experts per level
    G = n_es + n_esh                      # experts seen by a task-specific gate
    D0 = expert_dims[0]
    D = expert_dims[-1]

    idx = 0
    x_ref = refs[idx]; idx += 1
    level_refs = []
    for _ in range(n_level):
        lr = []
        for _ in range(n_expert_layers):
            lr.append((refs[idx], refs[idx + 1])); idx += 2
        level_refs.append(lr)
    tower_refs = []
    for _ in range(n_tower_layers):
        tower_refs.append((refs[idx], refs[idx + 1])); idx += 2
    mask_ref = refs[idx]; idx += 1
    o_ref = refs[idx]

    x = x_ref[...]                        # (TB, Din) level-1 input
    task_outs = None
    for l in range(n_level):
        has_shared = (l + 1) < n_level
        # One wide matmul per level: experts (layer 0) + all gates, lane-concatenated.
        W0, b0 = level_refs[l][0]
        y = jnp.dot(x, W0[...], preferred_element_type=jnp.float32) + b0[...]

        # Expert slab (lane-concatenated over experts), ReLU; deeper layers block-diag.
        h = jnp.maximum(y[:, :E * D0], 0.0)
        for li in range(1, n_expert_layers):
            Wl, bl = level_refs[l][li]
            h = jnp.maximum(
                jnp.dot(h, Wl[...], preferred_element_type=jnp.float32) + bl[...], 0.0)

        gate_off = E * D0

        def expert_cols(e):
            return h[:, e * D:(e + 1) * D]

        outs = []
        for i in range(n_task):           # task-specific gates + pooling
            g = _softmax_lastdim(y[:, gate_off + i * G: gate_off + (i + 1) * G])
            cur = [expert_cols(e) for e in range(i * n_es, (i + 1) * n_es)] \
                + [expert_cols(e) for e in range(n_task * n_es, E)]
            outs.append(_weighted_pool(g, cur))
        if has_shared:                    # shared gate over all experts
            goff = gate_off + n_task * G
            g = _softmax_lastdim(y[:, goff: goff + E])
            outs.append(_weighted_pool(g, [expert_cols(e) for e in range(E)]))

        if l + 1 < n_level:
            # lane-concat [task0 | ... | task_{n-1} | shared] feeds the next level's
            # block-structured wide matmul.
            x = jnp.concatenate(outs, axis=-1)
        else:
            task_outs = outs

    # Towers (block-diagonal across tasks) + PredictionLayer, lane-dense output slab.
    th = jnp.concatenate(task_outs, axis=-1)
    for (Wt, bt) in tower_refs:
        th = jnp.maximum(
            jnp.dot(th, Wt[...], preferred_element_type=jnp.float32) + bt[...], 0.0)
    sig = 1.0 / (1.0 + jnp.exp(-th))
    m = mask_ref[...]                     # 1.0 on classification columns, 0.0 otherwise
    o_ref[...] = m * sig + (1.0 - m) * th


def pallas_ple_forward(embed_x, packed, *, n_task, n_es, n_esh, n_level, expert_dims):
    B, Din = embed_x.shape
    consts = []
    for lvl in packed["levels"]:
        for (W, b) in lvl:
            consts += [W, b]
    for (W, b) in packed["towers"]:
        consts += [W, b]
    consts.append(packed["sig_mask"])
    out_dim = packed["sig_mask"].shape[1]

    const_bytes = sum(int(a.size) * 4 for a in consts)
    work_cols = Din + out_dim \
        + sum(W.shape[1] for lvl in packed["levels"] for (W, _) in lvl) \
        + sum(W.shape[1] for (W, _) in packed["towers"])
    budget = _vmem_budget_bytes()
    TB = _pick_batch_tile(B, 4 * work_cols, const_bytes, budget)

    kernel = functools.partial(
        _ple_fused_kernel, n_task=n_task, n_es=n_es, n_esh=n_esh, n_level=n_level,
        expert_dims=tuple(expert_dims), n_tower_layers=len(packed["towers"]))

    in_specs = [pl.BlockSpec((TB, Din), lambda i: (i, 0))]
    in_specs += [_const_spec(c.shape) for c in consts]

    return pl.pallas_call(
        kernel,
        out_shape=jax.ShapeDtypeStruct((B, out_dim), jnp.float32),
        grid=(B // TB,),
        in_specs=in_specs,
        out_specs=pl.BlockSpec((TB, out_dim), lambda i: (i, 0)),
        compiler_params=pltpu.CompilerParams(
            dimension_semantics=("parallel",),
            vmem_limit_bytes=int(budget)),
    )(embed_x, *consts)


# --------------------------- parameter construction ----------------------------

def _init_linear(key, din, dout):
    kw, kb = jax.random.split(key)
    bound = 1.0 / math.sqrt(din)
    w = jax.random.uniform(kw, (din, dout), jnp.float32, -bound, bound)
    b = jax.random.uniform(kb, (dout,), jnp.float32, -bound, bound)
    return w, b


def _init_bn(key, d):
    k1, k2, k3, k4 = jax.random.split(key, 4)
    gamma = 1.0 + 0.1 * jax.random.normal(k1, (d,), jnp.float32)
    beta = 0.1 * jax.random.normal(k2, (d,), jnp.float32)
    mean = 0.1 * jax.random.normal(k3, (d,), jnp.float32)
    var = jax.random.uniform(k4, (d,), jnp.float32, 0.5, 1.5)
    return gamma, beta, mean, var


def init_mlp(key, din, dims):
    """Linear + eval-mode BatchNorm folded into (W', b'); b' stored as (1, d)."""
    layers = []
    for d in dims:
        key, kl, kb = jax.random.split(key, 3)
        w, b = _init_linear(kl, din, d)
        gamma, beta, mean, var = _init_bn(kb, d)
        scale = gamma / jnp.sqrt(var + 1e-5)
        shift = beta - mean * scale
        layers.append((w * scale[None, :], (b * scale + shift).reshape(1, d)))
        din = d
    return layers


def init_ple_raw(key, n_features, embed_dim, vocab_size, task_types, n_level,
                 n_es, n_esh, expert_dims, tower_dims_list):
    n_task = len(task_types)
    input_dims = n_features * embed_dim
    E = n_task * n_es + n_esh
    G = n_es + n_esh
    keys = jax.random.split(key, 1 + n_level + n_task)
    raw = {
        "embed_tables": [0.1 * jax.random.normal(k, (vocab_size, embed_dim), jnp.float32)
                         for k in jax.random.split(keys[0], n_features)],
        "cgc": [],
        "towers": [init_mlp(keys[1 + n_level + t], expert_dims[-1], tower_dims_list[t])
                   for t in range(n_task)],
    }
    for l in range(n_level):
        din = input_dims if l == 0 else expert_dims[-1]
        kl = jax.random.split(keys[1 + l], E + n_task + 1)
        level = {
            # expert order: task0 specific..., task1 specific..., shared experts
            "experts": [init_mlp(kl[e], din, expert_dims) for e in range(E)],
            "gates_specific": [init_mlp(kl[E + i], din, [G])[0] for i in range(n_task)],
        }
        if l + 1 < n_level:
            level["gate_shared"] = init_mlp(kl[E + n_task], din, [E])[0]
        raw["cgc"].append(level)
    return raw


def _block_diag(mats):
    rows = sum(m.shape[0] for m in mats)
    cols = sum(m.shape[1] for m in mats)
    out = jnp.zeros((rows, cols), jnp.float32)
    r = c = 0
    for m in mats:
        out = out.at[r:r + m.shape[0], c:c + m.shape[1]].set(m)
        r += m.shape[0]
        c += m.shape[1]
    return out


def _pack_level(level_raw, *, cur_level, n_level, n_task, n_es, n_esh, in_dim):
    """Lane-concatenate expert layer-0 + gate weights into one (K, N) slab.

    Level 1 shares a single input; levels > 1 have n_task+1 input groups, so the slab
    is block-structured over the concatenated input [task0 | ... | task_{n-1} | shared].
    Deeper expert layers are packed block-diagonally across experts.
    """
    E = n_task * n_es + n_esh
    G = n_es + n_esh
    has_shared = cur_level < n_level
    experts = level_raw["experts"]
    D0 = experts[0][0][0].shape[1]
    n_groups = 1 if cur_level == 1 else (n_task + 1)
    K = n_groups * in_dim
    N0 = E * D0 + n_task * G + (E if has_shared else 0)

    def grp_expert(e):
        if cur_level == 1:
            return 0
        return e // n_es if e < n_task * n_es else n_task

    def grp_gate(i):              # i == n_task -> shared gate (uses shared input)
        return 0 if cur_level == 1 else i

    W0 = jnp.zeros((K, N0), jnp.float32)
    b0 = jnp.zeros((1, N0), jnp.float32)
    for e in range(E):
        We, be = experts[e][0]
        r = grp_expert(e) * in_dim
        W0 = W0.at[r:r + in_dim, e * D0:(e + 1) * D0].set(We)
        b0 = b0.at[:, e * D0:(e + 1) * D0].set(be)
    off = E * D0
    for i in range(n_task):
        Wg, bg = level_raw["gates_specific"][i]
        r = grp_gate(i) * in_dim
        W0 = W0.at[r:r + in_dim, off + i * G:off + (i + 1) * G].set(Wg)
        b0 = b0.at[:, off + i * G:off + (i + 1) * G].set(bg)
    if has_shared:
        Wg, bg = level_raw["gate_shared"]
        r = grp_gate(n_task) * in_dim
        goff = off + n_task * G
        W0 = W0.at[r:r + in_dim, goff:goff + E].set(Wg)
        b0 = b0.at[:, goff:goff + E].set(bg)

    packed = [(W0, b0)]
    for li in range(1, len(experts[0])):
        Wbd = _block_diag([experts[e][li][0] for e in range(E)])
        bcat = jnp.concatenate([experts[e][li][1] for e in range(E)], axis=1)
        packed.append((Wbd, bcat))
    return packed


def pack_ple(raw, *, task_types, n_level, n_es, n_esh, input_dims, expert_dims):
    n_task = len(task_types)
    levels = []
    for l in range(n_level):
        din = input_dims if l == 0 else expert_dims[-1]
        levels.append(_pack_level(raw["cgc"][l], cur_level=l + 1, n_level=n_level,
                                  n_task=n_task, n_es=n_es, n_esh=n_esh, in_dim=din))
    towers_raw = raw["towers"]
    n_tower_layers = len(towers_raw[0])
    assert all(len(t) == n_tower_layers for t in towers_raw), \
        "block-diagonal tower packing requires equal tower depths"
    towers = []
    for li in range(n_tower_layers):
        towers.append((
            _block_diag([towers_raw[t][li][0] for t in range(n_task)]),
            jnp.concatenate([towers_raw[t][li][1] for t in range(n_task)], axis=1)))
    mask_parts = [jnp.full((1, towers_raw[t][-1][0].shape[1]),
                           1.0 if task_types[t] == "classification" else 0.0, jnp.float32)
                  for t in range(n_task)]
    return {"levels": levels, "towers": towers,
            "sig_mask": jnp.concatenate(mask_parts, axis=1)}


# ----------------------------------- forward -----------------------------------

def ple_forward(x_ids, embed_tables, packed, *, n_task, n_es, n_esh, n_level, expert_dims):
    # EmbeddingLayer(squeeze_dim=True): gather + concat kept in XLA.
    # TODO(synk): at serving scale fuse the gather into the kernel with
    # PrefetchScalarGridSpec (x_ids as scalar prefetch + pl.Element row-gather).
    embed_x = jnp.concatenate(
        [embed_tables[j][x_ids[:, j]] for j in range(x_ids.shape[1])], axis=1)
    return pallas_ple_forward(embed_x, packed, n_task=n_task, n_es=n_es, n_esh=n_esh,
                              n_level=n_level, expert_dims=expert_dims)


# ------------------------------ pure-JAX reference ------------------------------

def ple_forward_ref(x_ids, raw, task_types, n_level, n_es, n_esh):
    n_task = len(task_types)
    embed_x = jnp.concatenate(
        [raw["embed_tables"][j][x_ids[:, j]] for j in range(x_ids.shape[1])], axis=1)
    ple_inputs = [embed_x] * (n_task + 1)
    E = n_task * n_es + n_esh
    for l in range(n_level):
        lvl = raw["cgc"][l]
        expert_outs = []
        for e in range(E):
            inp = ple_inputs[e // n_es] if e < n_task * n_es else ple_inputs[-1]
            h = inp
            for (W, b) in lvl["experts"][e]:
                h = jnp.maximum(h @ W + b, 0.0)
            expert_outs.append(h)
        outs = []
        for i in range(n_task):
            W, b = lvl["gates_specific"][i]
            g = jax.nn.softmax(ple_inputs[i] @ W + b, axis=-1)
            cur = expert_outs[i * n_es:(i + 1) * n_es] + expert_outs[n_task * n_es:]
            stk = jnp.stack(cur, axis=1)
            outs.append(jnp.sum(g[:, :, None] * stk, axis=1))
        if l + 1 < n_level:
            W, b = lvl["gate_shared"]
            g = jax.nn.softmax(ple_inputs[-1] @ W + b, axis=-1)
            stk = jnp.stack(expert_outs, axis=1)
            outs.append(jnp.sum(g[:, :, None] * stk, axis=1))
        ple_inputs = outs
    ys = []
    for t in range(n_task):
        h = ple_inputs[t]
        for (W, b) in raw["towers"][t]:
            h = jnp.maximum(h @ W + b, 0.0)
        if task_types[t] == "classification":
            h = jax.nn.sigmoid(h)
        ys.append(h)
    return jnp.concatenate(ys, axis=1)


# ------------------------------------- main -------------------------------------

if __name__ == "__main__":
    key = jax.random.PRNGKey(0)
    k_param, k_data = jax.random.split(key)

    # Small synthetic PLE config.
    n_features, embed_dim, vocab_size = 4, 8, 50          # input_dims = 32
    task_types = ["classification", "regression"]
    n_level = 2
    n_expert_specific, n_expert_shared = 2, 1
    expert_dims = [16]
    tower_dims_list = [[8], [8]]
    batch = 8
    input_dims = n_features * embed_dim

    raw = init_ple_raw(k_param, n_features, embed_dim, vocab_size, task_types,
                       n_level, n_expert_specific, n_expert_shared,
                       expert_dims, tower_dims_list)
    packed = pack_ple(raw, task_types=task_types, n_level=n_level,
                      n_es=n_expert_specific, n_esh=n_expert_shared,
                      input_dims=input_dims, expert_dims=expert_dims)

    x_ids = jax.random.randint(k_data, (batch, n_features), 0, vocab_size, dtype=jnp.int32)

    fwd = jax.jit(lambda ids, tables, pk: ple_forward(
        ids, tables, pk, n_task=len(task_types), n_es=n_expert_specific,
        n_esh=n_expert_shared, n_level=n_level, expert_dims=expert_dims))
    out = jax.block_until_ready(fwd(x_ids, raw["embed_tables"], packed))

    ref = ple_forward_ref(x_ids, raw, task_types, n_level,
                          n_expert_specific, n_expert_shared)
    assert out.shape == (batch, sum(d[-1] for d in tower_dims_list)), out.shape
    assert jnp.allclose(out, ref, atol=1e-4, rtol=1e-4), float(jnp.max(jnp.abs(out - ref)))

    print("KERNEL_OK")
</pallas_src>

<mosaic_0001>
module attributes {stable_mosaic.version = 11 : i64} {
  func.func @_ple_fused_kernel(%arg0: i32, %arg1: memref<8x32xf32, #tpu.memory_space<vmem>>, %arg2: memref<32x91xf32, #tpu.memory_space<vmem>>, %arg3: memref<1x91xf32, #tpu.memory_space<vmem>>, %arg4: memref<48x86xf32, #tpu.memory_space<vmem>>, %arg5: memref<1x86xf32, #tpu.memory_space<vmem>>, %arg6: memref<32x16xf32, #tpu.memory_space<vmem>>, %arg7: memref<1x16xf32, #tpu.memory_space<vmem>>, %arg8: memref<1x16xf32, #tpu.memory_space<vmem>>, %arg9: memref<8x16xf32, #tpu.memory_space<vmem>>) attributes {dimension_semantics = [#tpu.dimension_semantics<parallel>], iteration_bounds = array<i64: 1>, scalar_prefetch = 0 : i64, scratch_operands = 0 : i64, tpu.core_type = #tpu.core_type<tc>, window_params = [{transform_indices = @transform_0, window_bounds = array<i64: 8, 32>}, {pipeline_mode = #tpu.pipeline_mode<synchronous>, transform_indices = @transform_1, window_bounds = array<i64: 32, 91>}, {pipeline_mode = #tpu.pipeline_mode<synchronous>, transform_indices = @transform_2, window_bounds = array<i64: 1, 91>}, {pipeline_mode = #tpu.pipeline_mode<synchronous>, transform_indices = @transform_3, window_bounds = array<i64: 48, 86>}, {pipeline_mode = #tpu.pipeline_mode<synchronous>, transform_indices = @transform_4, window_bounds = array<i64: 1, 86>}, {pipeline_mode = #tpu.pipeline_mode<synchronous>, transform_indices = @transform_5, window_bounds = array<i64: 32, 16>}, {pipeline_mode = #tpu.pipeline_mode<synchronous>, transform_indices = @transform_6, window_bounds = array<i64: 1, 16>}, {pipeline_mode = #tpu.pipeline_mode<synchronous>, transform_indices = @transform_7, window_bounds = array<i64: 1, 16>}, {transform_indices = @transform_8, window_bounds = array<i64: 8, 16>}]} {
    %c0 = arith.constant 0 : index
    %c0_0 = arith.constant 0 : index
    %0 = vector.load %arg1[%c0, %c0_0] : memref<8x32xf32, #tpu.memory_space<vmem>>, vector<8x32xf32>
    %c0_1 = arith.constant 0 : index
    %c0_2 = arith.constant 0 : index
    %1 = vector.load %arg2[%c0_1, %c0_2] : memref<32x91xf32, #tpu.memory_space<vmem>>, vector<32x91xf32>
    %cst = arith.constant dense<0.000000e+00> : vector<8x91xf32>
    %2 = tpu.matmul %0, %1, %cst {dimension_numbers = #tpu.dot_dimension_numbers<[1], [0], [0], [1], [0, 0, 1, 1], [], []>} : vector<8x32xf32>, vector<32x91xf32>, vector<8x91xf32> -> vector<8x91xf32>
    %c0_3 = arith.constant 0 : index
    %c0_4 = arith.constant 0 : index
    %3 = vector.load %arg3[%c0_3, %c0_4] : memref<1x91xf32, #tpu.memory_space<vmem>>, vector<1x91xf32>
    %4 = vector.broadcast %3 : vector<1x91xf32> to vector<8x91xf32>
    %5 = arith.addf %2, %4 : vector<8x91xf32>
    %6 = vector.extract_strided_slice %5 {offsets = [0, 0], sizes = [8, 80], strides = [1, 1]} : vector<8x91xf32> to vector<8x80xf32>
    %cst_5 = arith.constant 0.000000e+00 : f32
    %7 = vector.broadcast %cst_5 : f32 to vector<8x80xf32>
    %8 = arith.maximumf %6, %7 : vector<8x80xf32>
    %9 = vector.extract_strided_slice %5 {offsets = [0, 80], sizes = [8, 3], strides = [1, 1]} : vector<8x91xf32> to vector<8x3xf32>
    %cst_6 = arith.constant dense<0xFF800000> : vector<8xf32>
    %10 = vector.multi_reduction <maximumf>, %9, %cst_6 [1] : vector<8x3xf32> to vector<8xf32>
    %11 = vector.shape_cast %10 : vector<8xf32> to vector<8x1xf32>
    %12 = vector.broadcast %11 : vector<8x1xf32> to vector<8x3xf32>
    %13 = arith.subf %9, %12 : vector<8x3xf32>
    %14 = math.exp %13 : vector<8x3xf32>
    %cst_7 = arith.constant dense<0.000000e+00> : vector<8xf32>
    %15 = vector.multi_reduction <add>, %14, %cst_7 [1] : vector<8x3xf32> to vector<8xf32>
    %16 = vector.shape_cast %15 : vector<8xf32> to vector<8x1xf32>
    %17 = vector.broadcast %16 : vector<8x1xf32> to vector<8x3xf32>
    %18 = arith.divf %14, %17 : vector<8x3xf32>
    %19 = vector.extract_strided_slice %8 {offsets = [0, 0], sizes = [8, 16], strides = [1, 1]} : vector<8x80xf32> to vector<8x16xf32>
    %20 = vector.extract_strided_slice %8 {offsets = [0, 16], sizes = [8, 16], strides = [1, 1]} : vector<8x80xf32> to vector<8x16xf32>
    %21 = vector.extract_strided_slice %8 {offsets = [0, 64], sizes = [8, 16], strides = [1, 1]} : vector<8x80xf32> to vector<8x16xf32>
    %22 = vector.extract_strided_slice %18 {offsets = [0, 0], sizes = [8, 1], strides = [1, 1]} : vector<8x3xf32> to vector<8x1xf32>
    %23 = vector.broadcast %22 : vector<8x1xf32> to vector<8x16xf32>
    %24 = arith.mulf %23, %19 : vector<8x16xf32>
    %25 = vector.extract_strided_slice %18 {offsets = [0, 1], sizes = [8, 1], strides = [1, 1]} : vector<8x3xf32> to vector<8x1xf32>
    %26 = vector.broadcast %25 : vector<8x1xf32> to vector<8x16xf32>
    %27 = arith.mulf %26, %20 : vector<8x16xf32>
    %28 = vector.extract_strided_slice %18 {offsets = [0, 2], sizes = [8, 1], strides = [1, 1]} : vector<8x3xf32> to vector<8x1xf32>
    %29 = vector.broadcast %28 : vector<8x1xf32> to vector<8x16xf32>
    %30 = arith.mulf %29, %21 : vector<8x16xf32>
    %31 = arith.addf %24, %27 : vector<8x16xf32>
    %32 = arith.addf %31, %30 : vector<8x16xf32>
    %33 = vector.extract_strided_slice %5 {offsets = [0, 83], sizes = [8, 3], strides = [1, 1]} : vector<8x91xf32> to vector<8x3xf32>
    %cst_8 = arith.constant dense<0xFF800000> : vector<8xf32>
    %34 = vector.multi_reduction <maximumf>, %33, %cst_8 [1] : vector<8x3xf32> to vector<8xf32>
    %35 = vector.shape_cast %34 : vector<8xf32> to vector<8x1xf32>
    %36 = vector.broadcast %35 : vector<8x1xf32> to vector<8x3xf32>
    %37 = arith.subf %33, %36 : vector<8x3xf32>
    %38 = math.exp %37 : vector<8x3xf32>
    %cst_9 = arith.constant dense<0.000000e+00> : vector<8xf32>
    %39 = vector.multi_reduction <add>, %38, %cst_9 [1] : vector<8x3xf32> to vector<8xf32>
    %40 = vector.shape_cast %39 : vector<8xf32> to vector<8x1xf32>
    %41 = vector.broadcast %40 : vector<8x1xf32> to vector<8x3xf32>
    %42 = arith.divf %38, %41 : vector<8x3xf32>
    %43 = vector.extract_strided_slice %8 {offsets = [0, 32], sizes = [8, 16], strides = [1, 1]} : vector<8x80xf32> to vector<8x16xf32>
    %44 = vector.extract_strided_slice %8 {offsets = [0, 48], sizes = [8, 16], strides = [1, 1]} : vector<8x80xf32> to vector<8x16xf32>
    %45 = vector.extract_strided_slice %8 {offsets = [0, 64], sizes = [8, 16], strides = [1, 1]} : vector<8x80xf32> to vector<8x16xf32>
    %46 = vector.extract_strided_slice %42 {offsets = [0, 0], sizes = [8, 1], strides = [1, 1]} : vector<8x3xf32> to vector<8x1xf32>
    %47 = vector.broadcast %46 : vector<8x1xf32> to vector<8x16xf32>
    %48 = arith.mulf %47, %43 : vector<8x16xf32>
    %49 = vector.extract_strided_slice %42 {offsets = [0, 1], sizes = [8, 1], strides = [1, 1]} : vector<8x3xf32> to vector<8x1xf32>
    %50 = vector.broadcast %49 : vector<8x1xf32> to vector<8x16xf32>
    %51 = arith.mulf %50, %44 : vector<8x16xf32>
    %52 = vector.extract_strided_slice %42 {offsets = [0, 2], sizes = [8, 1], strides = [1, 1]} : vector<8x3xf32> to vector<8x1xf32>
    %53 = vector.broadcast %52 : vector<8x1xf32> to vector<8x16xf32>
    %54 = arith.mulf %53, %45 : vector<8x16xf32>
    %55 = arith.addf %48, %51 : vector<8x16xf32>
    %56 = arith.addf %55, %54 : vector<8x16xf32>
    %57 = vector.extract_strided_slice %5 {offsets = [0, 86], sizes = [8, 5], strides = [1, 1]} : vector<8x91xf32> to vector<8x5xf32>
    %cst_10 = arith.constant dense<0xFF800000> : vector<8xf32>
    %58 = vector.multi_reduction <maximumf>, %57, %cst_10 [1] : vector<8x5xf32> to vector<8xf32>
    %59 = vector.shape_cast %58 : vector<8xf32> to vector<8x1xf32>
    %60 = vector.broadcast %59 : vector<8x1xf32> to vector<8x5xf32>
    %61 = arith.subf %57, %60 : vector<8x5xf32>
    %62 = math.exp %61 : vector<8x5xf32>
    %cst_11 = arith.constant dense<0.000000e+00> : vector<8xf32>
    %63 = vector.multi_reduction <add>, %62, %cst_11 [1] : vector<8x5xf32> to vector<8xf32>
    %64 = vector.shape_cast %63 : vector<8xf32> to vector<8x1xf32>
    %65 = vector.broadcast %64 : vector<8x1xf32> to vector<8x5xf32>
    %66 = arith.divf %62, %65 : vector<8x5xf32>
    %67 = vector.extract_strided_slice %8 {offsets = [0, 0], sizes = [8, 16], strides = [1, 1]} : vector<8x80xf32> to vector<8x16xf32>
    %68 = vector.extract_strided_slice %8 {offsets = [0, 16], sizes = [8, 16], strides = [1, 1]} : vector<8x80xf32> to vector<8x16xf32>
    %69 = vector.extract_strided_slice %8 {offsets = [0, 32], sizes = [8, 16], strides = [1, 1]} : vector<8x80xf32> to vector<8x16xf32>
    %70 = vector.extract_strided_slice %8 {offsets = [0, 48], sizes = [8, 16], strides = [1, 1]} : vector<8x80xf32> to vector<8x16xf32>
    %71 = vector.extract_strided_slice %8 {offsets = [0, 64], sizes = [8, 16], strides = [1, 1]} : vector<8x80xf32> to vector<8x16xf32>
    %72 = vector.extract_strided_slice %66 {offsets = [0, 0], sizes = [8, 1], strides = [1, 1]} : vector<8x5xf32> to vector<8x1xf32>
    %73 = vector.broadcast %72 : vector<8x1xf32> to vector<8x16xf32>
    %74 = arith.mulf %73, %67 : vector<8x16xf32>
    %75 = vector.extract_strided_slice %66 {offsets = [0, 1], sizes = [8, 1], strides = [1, 1]} : vector<8x5xf32> to vector<8x1xf32>
    %76 = vector.broadcast %75 : vector<8x1xf32> to vector<8x16xf32>
    %77 = arith.mulf %76, %68 : vector<8x16xf32>
    %78 = vector.extract_strided_slice %66 {offsets = [0, 2], sizes = [8, 1], strides = [1, 1]} : vector<8x5xf32> to vector<8x1xf32>
    %79 = vector.broadcast %78 : vector<8x1xf32> to vector<8x16xf32>
    %80 = arith.mulf %79, %69 : vector<8x16xf32>
    %81 = vector.extract_strided_slice %66 {offsets = [0, 3], sizes = [8, 1], strides = [1, 1]} : vector<8x5xf32> to vector<8x1xf32>
    %82 = vector.broadcast %81 : vector<8x1xf32> to vector<8x16xf32>
    %83 = arith.mulf %82, %70 : vector<8x16xf32>
    %84 = vector.extract_strided_slice %66 {offsets = [0, 4], sizes = [8, 1], strides = [1, 1]} : vector<8x5xf32> to vector<8x1xf32>
    %85 = vector.broadcast %84 : vector<8x1xf32> to vector<8x16xf32>
    %86 = arith.mulf %85, %71 : vector<8x16xf32>
    %87 = arith.addf %74, %77 : vector<8x16xf32>
    %88 = arith.addf %80, %83 : vector<8x16xf32>
    %89 = arith.addf %87, %88 : vector<8x16xf32>
    %90 = arith.addf %89, %86 : vector<8x16xf32>
    %91 = tpu.concatenate %32, %56, %90 in 1 : vector<8x16xf32>, vector<8x16xf32>, vector<8x16xf32> -> vector<8x48xf32>
    %c0_12 = arith.constant 0 : index
    %c0_13 = arith.constant 0 : index
    %92 = vector.load %arg4[%c0_12, %c0_13] : memref<48x86xf32, #tpu.memory_space<vmem>>, vector<48x86xf32>
    %cst_14 = arith.constant dense<0.000000e+00> : vector<8x86xf32>
    %93 = tpu.matmul %91, %92, %cst_14 {dimension_numbers = #tpu.dot_dimension_numbers<[1], [0], [0], [1], [0, 0, 1, 1], [], []>} : vector<8x48xf32>, vector<48x86xf32>, vector<8x86xf32> -> vector<8x86xf32>
    %c0_15 = arith.constant 0 : index
    %c0_16 = arith.constant 0 : index
    %94 = vector.load %arg5[%c0_15, %c0_16] : memref<1x86xf32, #tpu.memory_space<vmem>>, vector<1x86xf32>
    %95 = vector.broadcast %94 : vector<1x86xf32> to vector<8x86xf32>
    %96 = arith.addf %93, %95 : vector<8x86xf32>
    %97 = vector.extract_strided_slice %96 {offsets = [0, 0], sizes = [8, 80], strides = [1, 1]} : vector<8x86xf32> to vector<8x80xf32>
    %cst_17 = arith.constant 0.000000e+00 : f32
    %98 = vector.broadcast %cst_17 : f32 to vector<8x80xf32>
    %99 = arith.maximumf %97, %98 : vector<8x80xf32>
    %100 = vector.extract_strided_slice %96 {offsets = [0, 80], sizes = [8, 3], strides = [1, 1]} : vector<8x86xf32> to vector<8x3xf32>
    %cst_18 = arith.constant dense<0xFF800000> : vector<8xf32>
    %101 = vector.multi_reduction <maximumf>, %100, %cst_18 [1] : vector<8x3xf32> to vector<8xf32>
    %102 = vector.shape_cast %101 : vector<8xf32> to vector<8x1xf32>
    %103 = vector.broadcast %102 : vector<8x1xf32> to vector<8x3xf32>
    %104 = arith.subf %100, %103 : vector<8x3xf32>
    %105 = math.exp %104 : vector<8x3xf32>
    %cst_19 = arith.constant dense<0.000000e+00> : vector<8xf32>
    %106 = vector.multi_reduction <add>, %105, %cst_19 [1] : vector<8x3xf32> to vector<8xf32>
    %107 = vector.shape_cast %106 : vector<8xf32> to vector<8x1xf32>
    %108 = vector.broadcast %107 : vector<8x1xf32> to vector<8x3xf32>
    %109 = arith.divf %105, %108 : vector<8x3xf32>
    %110 = vector.extract_strided_slice %99 {offsets = [0, 0], sizes = [8, 16], strides = [1, 1]} : vector<8x80xf32> to vector<8x16xf32>
    %111 = vector.extract_strided_slice %99 {offsets = [0, 16], sizes = [8, 16], strides = [1, 1]} : vector<8x80xf32> to vector<8x16xf32>
    %112 = vector.extract_strided_slice %99 {offsets = [0, 64], sizes = [8, 16], strides = [1, 1]} : vector<8x80xf32> to vector<8x16xf32>
    %113 = vector.extract_strided_slice %109 {offsets = [0, 0], sizes = [8, 1], strides = [1, 1]} : vector<8x3xf32> to vector<8x1xf32>
    %114 = vector.broadcast %113 : vector<8x1xf32> to vector<8x16xf32>
    %115 = arith.mulf %114, %110 : vector<8x16xf32>
    %116 = vector.extract_strided_slice %109 {offsets = [0, 1], sizes = [8, 1], strides = [1, 1]} : vector<8x3xf32> to vector<8x1xf32>
    %117 = vector.broadcast %116 : vector<8x1xf32> to vector<8x16xf32>
    %118 = arith.mulf %117, %111 : vector<8x16xf32>
    %119 = vector.extract_strided_slice %109 {offsets = [0, 2], sizes = [8, 1], strides = [1, 1]} : vector<8x3xf32> to vector<8x1xf32>
    %120 = vector.broadcast %119 : vector<8x1xf32> to vector<8x16xf32>
    %121 = arith.mulf %120, %112 : vector<8x16xf32>
    %122 = arith.addf %115, %118 : vector<8x16xf32>
    %123 = arith.addf %122, %121 : vector<8x16xf32>
    %124 = vector.extract_strided_slice %96 {offsets = [0, 83], sizes = [8, 3], strides = [1, 1]} : vector<8x86xf32> to vector<8x3xf32>
    %cst_20 = arith.constant dense<0xFF800000> : vector<8xf32>
    %125 = vector.multi_reduction <maximumf>, %124, %cst_20 [1] : vector<8x3xf32> to vector<8xf32>
    %126 = vector.shape_cast %125 : vector<8xf32> to vector<8x1xf32>
    %127 = vector.broadcast %126 : vector<8x1xf32> to vector<8x3xf32>
    %128 = arith.subf %124, %127 : vector<8x3xf32>
    %129 = math.exp %128 : vector<8x3xf32>
    %cst_21 = arith.constant dense<0.000000e+00> : vector<8xf32>
    %130 = vector.multi_reduction <add>, %129, %cst_21 [1] : vector<8x3xf32> to vector<8xf32>
    %131 = vector.shape_cast %130 : vector<8xf32> to vector<8x1xf32>
    %132 = vector.broadcast %131 : vector<8x1xf32> to vector<8x3xf32>
    %133 = arith.divf %129, %132 : vector<8x3xf32>
    %134 = vector.extract_strided_slice %99 {offsets = [0, 32], sizes = [8, 16], strides = [1, 1]} : vector<8x80xf32> to vector<8x16xf32>
    %135 = vector.extract_strided_slice %99 {offsets = [0, 48], sizes = [8, 16], strides = [1, 1]} : vector<8x80xf32> to vector<8x16xf32>
    %136 = vector.extract_strided_slice %99 {offsets = [0, 64], sizes = [8, 16], strides = [1, 1]} : vector<8x80xf32> to vector<8x16xf32>
    %137 = vector.extract_strided_slice %133 {offsets = [0, 0], sizes = [8, 1], strides = [1, 1]} : vector<8x3xf32> to vector<8x1xf32>
    %138 = vector.broadcast %137 : vector<8x1xf32> to vector<8x16xf32>
    %139 = arith.mulf %138, %134 : vector<8x16xf32>
    %140 = vector.extract_strided_slice %133 {offsets = [0, 1], sizes = [8, 1], strides = [1, 1]} : vector<8x3xf32> to vector<8x1xf32>
    %141 = vector.broadcast %140 : vector<8x1xf32> to vector<8x16xf32>
    %142 = arith.mulf %141, %135 : vector<8x16xf32>
    %143 = vector.extract_strided_slice %133 {offsets = [0, 2], sizes = [8, 1], strides = [1, 1]} : vector<8x3xf32> to vector<8x1xf32>
    %144 = vector.broadcast %143 : vector<8x1xf32> to vector<8x16xf32>
    %145 = arith.mulf %144, %136 : vector<8x16xf32>
    %146 = arith.addf %139, %142 : vector<8x16xf32>
    %147 = arith.addf %146, %145 : vector<8x16xf32>
    %148 = tpu.concatenate %123, %147 in 1 : vector<8x16xf32>, vector<8x16xf32> -> vector<8x32xf32>
    %c0_22 = arith.constant 0 : index
    %c0_23 = arith.constant 0 : index
    %149 = vector.load %arg6[%c0_22, %c0_23] : memref<32x16xf32, #tpu.memory_space<vmem>>, vector<32x16xf32>
    %cst_24 = arith.constant dense<0.000000e+00> : vector<8x16xf32>
    %150 = tpu.matmul %148, %149, %cst_24 {dimension_numbers = #tpu.dot_dimension_numbers<[1], [0], [0], [1], [0, 0, 1, 1], [], []>} : vector<8x32xf32>, vector<32x16xf32>, vector<8x16xf32> -> vector<8x16xf32>
    %c0_25 = arith.constant 0 : index
    %c0_26 = arith.constant 0 : index
    %151 = vector.load %arg7[%c0_25, %c0_26] : memref<1x16xf32, #tpu.memory_space<vmem>>, vector<1x16xf32>
    %152 = vector.broadcast %151 : vector<1x16xf32> to vector<8x16xf32>
    %153 = arith.addf %150, %152 : vector<8x16xf32>
    %cst_27 = arith.constant 0.000000e+00 : f32
    %154 = vector.broadcast %cst_27 : f32 to vector<8x16xf32>
    %155 = arith.maximumf %153, %154 : vector<8x16xf32>
    %cst_28 = arith.constant 0.000000e+00 : f32
    %156 = vector.broadcast %cst_28 : f32 to vector<8x16xf32>
    %157 = arith.subf %156, %155 : vector<8x16xf32>
    %158 = math.exp %157 : vector<8x16xf32>
    %cst_29 = arith.constant 1.000000e+00 : f32
    %159 = vector.broadcast %cst_29 : f32 to vector<8x16xf32>
    %160 = arith.addf %159, %158 : vector<8x16xf32>
    %cst_30 = arith.constant 1.000000e+00 : f32
    %161 = vector.broadcast %cst_30 : f32 to vector<8x16xf32>
    %162 = arith.divf %161, %160 : vector<8x16xf32>
    %c0_31 = arith.constant 0 : index
    %c0_32 = arith.constant 0 : index
    %163 = vector.load %arg8[%c0_31, %c0_32] : memref<1x16xf32, #tpu.memory_space<vmem>>, vector<1x16xf32>
    %164 = vector.broadcast %163 : vector<1x16xf32> to vector<8x16xf32>
    %165 = arith.mulf %164, %162 : vector<8x16xf32>
    %cst_33 = arith.constant 1.000000e+00 : f32
    %166 = vector.broadcast %cst_33 : f32 to vector<1x16xf32>
    %167 = arith.subf %166, %163 : vector<1x16xf32>
    %168 = vector.broadcast %167 : vector<1x16xf32> to vector<8x16xf32>
    %169 = arith.mulf %168, %155 : vector<8x16xf32>
    %170 = arith.addf %165, %169 : vector<8x16xf32>
    %c0_34 = arith.constant 0 : index
    %c0_35 = arith.constant 0 : index
    %171 = vector.load %arg9[%c0_34, %c0_35] : memref<8x16xf32, #tpu.memory_space<vmem>>, vector<8x16xf32>
    tpu.vector_store %arg9[%c0_34, %c0_35], %170 {strides = array<i32>} : memref<8x16xf32, #tpu.memory_space<vmem>>, vector<8x16xf32>,
    return
  }
  func.func @transform_0(%arg0: i32) -> (i32, i32) {
    %c0_i32 = arith.constant 0 : i32
    %c0_i32_0 = arith.constant 0 : i32
    return %arg0, %c0_i32 : i32, i32
  }
  func.func @transform_1(%arg0: i32) -> (i32, i32) {
    %c0_i32 = arith.constant 0 : i32
    %c0_i32_0 = arith.constant 0 : i32
    %c0_i32_1 = arith.constant 0 : i32
    return %c0_i32, %c0_i32_0 : i32, i32
  }
  func.func @transform_2(%arg0: i32) -> (i32, i32) {
    %c0_i32 = arith.constant 0 : i32
    %c0_i32_0 = arith.constant 0 : i32
    %c0_i32_1 = arith.constant 0 : i32
    return %c0_i32, %c0_i32_0 : i32, i32
  }
  func.func @transform_3(%arg0: i32) -> (i32, i32) {
    %c0_i32 = arith.constant 0 : i32
    %c0_i32_0 = arith.constant 0 : i32
    %c0_i32_1 = arith.constant 0 : i32
    return %c0_i32, %c0_i32_0 : i32, i32
  }
  func.func @transform_4(%arg0: i32) -> (i32, i32) {
    %c0_i32 = arith.constant 0 : i32
    %c0_i32_0 = arith.constant 0 : i32
    %c0_i32_1 = arith.constant 0 : i32
    return %c0_i32, %c0_i32_0 : i32, i32
  }
  func.func @transform_5(%arg0: i32) -> (i32, i32) {
    %c0_i32 = arith.constant 0 : i32
    %c0_i32_0 = arith.constant 0 : i32
    %c0_i32_1 = arith.constant 0 : i32
    return %c0_i32, %c0_i32_0 : i32, i32
  }
  func.func @transform_6(%arg0: i32) -> (i32, i32) {
    %c0_i32 = arith.constant 0 : i32
    %c0_i32_0 = arith.constant 0 : i32
    %c0_i32_1 = arith.constant 0 : i32
    return %c0_i32, %c0_i32_0 : i32, i32
  }
  func.func @transform_7(%arg0: i32) -> (i32, i32) {
    %c0_i32 = arith.constant 0 : i32
    %c0_i32_0 = arith.constant 0 : i32
    %c0_i32_1 = arith.constant 0 : i32
    return %c0_i32, %c0_i32_0 : i32, i32
  }
  func.func @transform_8(%arg0: i32) -> (i32, i32) {
    %c0_i32 = arith.constant 0 : i32
    %c0_i32_0 = arith.constant 0 : i32
    return %arg0, %c0_i32 : i32, i32
  }
}

</mosaic_0001>

<llo_original>
// kernel: _lambda_.1
$region0: #{_lambda_.1}
  #allocation0 [shape = 'u32[]', space=smem, size = 0x4, offset = 0x4, fixed_abs, tag = 'smem constant byte address 0x4 - core index']
  #allocation1 [shape = 'u32[72,128]{1,0:T(1,128)}', space=vmem, size = 0x9000, scoped, tag = 'internal scratch']
  %s0 = inlined_call_operand.vmem [shape: f32[8,32], index: 0, kind: input, shape index: {}]
  %s1 = inlined_call_operand.vmem [shape: f32[32,91], index: 1, kind: input, shape index: {}]
  %s2 = inlined_call_operand.vmem [shape: f32[1,91], index: 2, kind: input, shape index: {}]
  %s3 = inlined_call_operand.vmem [shape: f32[48,86], index: 3, kind: input, shape index: {}]
  %s4 = inlined_call_operand.vmem [shape: f32[1,86], index: 4, kind: input, shape index: {}]
  %s5 = inlined_call_operand.vmem [shape: f32[32,16], index: 5, kind: input, shape index: {}]
  %s6 = inlined_call_operand.vmem [shape: f32[1,16], index: 6, kind: input, shape index: {}]
  %s7 = inlined_call_operand.vmem [shape: f32[1,16], index: 7, kind: input, shape index: {}]
  %s8 = inlined_call_operand.hbm [shape: f32[8,16], index: 8, kind: output, shape index: {}]
  %s9 = sld [smem:[#allocation0]]
  $region42: #{_lambda_.1} parent=0
    _
  %s11 = ssub.s32 1, %s9
  %s12 = scalar_select 0, %s11, %s9
  $region1: #{_lambda_.1} parent=0
    #allocation2 [shape = 'u8[4096]{0}', space=vmem, size = 0x1000, scoped, tag = 'output window, operand 0, single buffered']
    #allocation3 [shape = 's32[1]{0}', space=sflag, size = 0x4, scoped, tag = 'scoped memory for _lambda_.1']
    %13 = vsyncpa [#allocation3], 0
    // Predicated region
    $region2: #{_lambda_.1} parent=1 // pred_check
      _
    $region3: #{_lambda_.1} parent=1 // pred_check_branch
      %15 = sbr.rel (0) target = $region5
    $region4: #{_lambda_.1} parent=1 // pred_region
      _
    $region5: #{_lambda_.1} parent=1 // pred_fallthru
      _
    // Predicated region
    $region6: #{_lambda_.1} parent=1 // pred_check
      _
    $region7: #{_lambda_.1} parent=1 // pred_check_branch
      %17 = sbr.rel (0) target = $region9
    $region8: #{_lambda_.1} parent=1 // pred_region
      _
    $region9: #{_lambda_.1} parent=1 // pred_fallthru
      _
    // Predicated region
    $region10: #{_lambda_.1} parent=1 // pred_check
      _
    $region11: #{_lambda_.1} parent=1 // pred_check_branch
      %19 = sbr.rel (0) target = $region13
    $region12: #{_lambda_.1} parent=1 // pred_region
      _
    $region13: #{_lambda_.1} parent=1 // pred_fallthru
      _
    // Predicated region
    $region14: #{_lambda_.1} parent=1 // pred_check
      _
    $region15: #{_lambda_.1} parent=1 // pred_check_branch
      %21 = sbr.rel (0) target = $region17
    $region16: #{_lambda_.1} parent=1 // pred_region
      _
    $region17: #{_lambda_.1} parent=1 // pred_fallthru
      _
    // Predicated region
    $region18: #{_lambda_.1} parent=1 // pred_check
      _
    $region19: #{_lambda_.1} parent=1 // pred_check_branch
      %23 = sbr.rel (0) target = $region21
    $region20: #{_lambda_.1} parent=1 // pred_region
      _
    $region21: #{_lambda_.1} parent=1 // pred_fallthru
      _
    // Predicated region
    $region22: #{_lambda_.1} parent=1 // pred_check
      _
    $region23: #{_lambda_.1} parent=1 // pred_check_branch
      %25 = sbr.rel (0) target = $region25
    $region24: #{_lambda_.1} parent=1 // pred_region
      _
    $region25: #{_lambda_.1} parent=1 // pred_fallthru
      _
    // Predicated region
    $region26: #{_lambda_.1} parent=1 // pred_check
      _
    $region27: #{_lambda_.1} parent=1 // pred_check_branch
      %27 = sbr.rel (0) target = $region29
    $region28: #{_lambda_.1} parent=1 // pred_region
      _
    $region29: #{_lambda_.1} parent=1 // pred_fallthru
      _
    // Predicated region
    $region30: #{_lambda_.1} parent=1 // pred_check
      _
    $region31: #{_lambda_.1} parent=1 // pred_check_branch
      %29 = sbr.rel (0) target = $region33
    $region32: #{_lambda_.1} parent=1 // pred_region
      _
    $region33: #{_lambda_.1} parent=1 // pred_fallthru
      _
    %v30 = vld [vmem:[%s0] sm:$0xff]
    %v31 = vld [vmem:[%s1] sm:$0xff]
    %v32 = vld [vmem:[%s1 + $0x8] sm:$0xff]
    %v33 = vld [vmem:[%s1 + $0x10] sm:$0xff]
    %v34 = vld [vmem:[%s1 + $0x18] sm:$0xff]
    %v35 = vld [vmem:[%s2] sm:$0x1]
    %v37 = vperm.slane %v35, 0
    %vm39 = vcmask 261120
    %v41 = vsel %vm39, %v30, 0
    %43 = vmatpush.msra.mxu0 0.0
    %44 = vmatpush.msra.mxu0 0.0
    %45 = vmatpush.msra.mxu0 0.0
    %46 = vmatpush.msra.mxu0 0.0
    %47 = vmatpush.msra.mxu0 0.0
    %48 = vmatpush.msra.mxu0 0.0
    %49 = vmatpush.msra.mxu0 0.0
    %50 = vmatpush.msra.mxu0 0.0
    %51 = vmatpush.msra.mxu0 0.0
    %52 = vmatpush.msra.mxu0 0.0
    %53 = vmatpush.msra.mxu0 0.0
    %54 = vmatpush.msra.mxu0 0.0
    %55 = vmatpush.msra.mxu0 %v34
    %56 = vmatpush.msra.mxu0 %v33
    %57 = vmatpush.msra.mxu0 %v32
    %58 = vmatpush.msra.mxu0 %v31
    %59 = vmatmul.f32.gmra.mxu0 %v41
    %v60 = vpop.f32.mrf.mxu0
    %v61 = vadd.f32 %v37, %v60
    %62 = vdwg.mxu0
    %v63 = vmax.f32 %v61, 0.0
    %vm64 = vcmask 679552
    %v65 = vsel %vm64, %v61, -inf
    %66 = vmax.xlane.f32.xlu0 %v65
    %v67 = vpop.xlane.xlu0 %66
    %v68 = vsub.f32 %v61, %v67
    %v69 = vmul.f32 %v68, 1.442695
    %v70 = vpow.pop %v69
    %72 = vrot.lane.b32.xlu0 %v70, 48
    %v73 = vpop.permute.xlu0 %72
    %vm75 = vcmask 23552
    %v76 = vsel %vm75, %v73, 0.0
    %77 = vadd.xlane.f32.xlu0 %v76
    %v78 = vpop.xlane.xlu0 %77
    %v79 = vrcp.pop %v78
    %v80 = vmul.f32 %v78, %v79
    %v81 = vsub.f32 1.0, %v80
    %v82 = vmul.f32 %v79, %v81
    %v83 = vadd.f32 %v79, %v82
    %vm84 = vweird.f32 %v78
    %vm85 = vweird.f32 %v79
    %vm86 = vmor %vm84, %vm85
    %v87 = vsel %vm86, %v79, %v83
    %v88 = vand.u32 2147483647, %v78
    %vm89 = vcmp.eq.f32.partialorder %v88, 8.507059e+37
    %v90 = vand.u32 %v78, 2147483648
    %v91 = vor.u32 1.1754944e-38, %v90
    %v92 = vsel %vm89, %v91, %v87
    %v93 = vmul.f32 %v70, %v92
    %95 = vset.pattern.permute.xlu0 80
    %96 = vperm.xlu0 %95, %v93
    %v97 = vpop.permute.xlu0 %96
    %v99 = vmul.f32 %v97, %v63
    %100 = vset.pattern.permute.xlu0 81
    %101 = vperm.xlu0 %100, %v93
    %v102 = vpop.permute.xlu0 %101
    %v104 = vmul.f32 %v102, %v63
    %105 = vset.pattern.permute.xlu0 82
    %106 = vperm.xlu0 %105, %v93
    %v107 = vpop.permute.xlu0 %106
    %v109 = vmul.f32 %v107, %v63
    %111 = vrot.lane.b32.xlu0 %v104, 112
    %v112 = vpop.permute.xlu0 %111
    %v114 = vadd.f32 %v99, %v112
    %116 = vrot.lane.b32.xlu0 %v109, 64
    %v117 = vpop.permute.xlu0 %116
    %v119 = vadd.f32 %v114, %v117
    %vm120 = vcmask 704152
    %v121 = vsel %vm120, %v61, -inf
    %122 = vmax.xlane.f32.xlu0 %v121
    %v123 = vpop.xlane.xlu0 %122
    %v124 = vsub.f32 %v61, %v123
    %v125 = vmul.f32 %v124, 1.442695
    %v126 = vpow.pop %v125
    %128 = vrot.lane.b32.xlu0 %v126, 45
    %v129 = vpop.permute.xlu0 %128
    %v131 = vsel %vm75, %v129, 0.0
    %132 = vadd.xlane.f32.xlu0 %v131
    %v133 = vpop.xlane.xlu0 %132
    %v134 = vrcp.pop %v133
    %v135 = vmul.f32 %v133, %v134
    %v136 = vsub.f32 1.0, %v135
    %v137 = vmul.f32 %v134, %v136
    %v138 = vadd.f32 %v134, %v137
    %vm139 = vweird.f32 %v133
    %vm140 = vweird.f32 %v134
    %vm141 = vmor %vm139, %vm140
    %v142 = vsel %vm141, %v134, %v138
    %v143 = vand.u32 2147483647, %v133
    %vm144 = vcmp.eq.f32.partialorder %v143, 8.507059e+37
    %v145 = vand.u32 %v133, 2147483648
    %v146 = vor.u32 1.1754944e-38, %v145
    %v147 = vsel %vm144, %v146, %v142
    %v148 = vmul.f32 %v126, %v147
    %150 = vset.pattern.permute.xlu0 83
    %151 = vperm.xlu0 %150, %v148
    %v152 = vpop.permute.xlu0 %151
    %v154 = vmul.f32 %v152, %v63
    %155 = vset.pattern.permute.xlu0 84
    %156 = vperm.xlu0 %155, %v148
    %v157 = vpop.permute.xlu0 %156
    %v159 = vmul.f32 %v157, %v63
    %160 = vset.pattern.permute.xlu0 85
    %161 = vperm.xlu0 %160, %v148
    %v162 = vpop.permute.xlu0 %161
    %v164 = vmul.f32 %v162, %v63
    %166 = vrot.lane.b32.xlu0 %v159, 112
    %v167 = vpop.permute.xlu0 %166
    %v169 = vadd.f32 %v154, %v167
    %171 = vrot.lane.b32.xlu0 %v164, 96
    %v172 = vpop.permute.xlu0 %171
    %v174 = vadd.f32 %v169, %v172
    %vm175 = vcmask 745136
    %v176 = vsel %vm175, %v61, -inf
    %177 = vmax.xlane.f32.xlu0 %v176
    %v178 = vpop.xlane.xlu0 %177
    %v179 = vsub.f32 %v61, %v178
    %v180 = vmul.f32 %v179, 1.442695
    %v181 = vpow.pop %v180
    %183 = vrot.lane.b32.xlu0 %v181, 42
    %v184 = vpop.permute.xlu0 %183
    %vm186 = vcmask 39936
    %v187 = vsel %vm186, %v184, 0.0
    %188 = vadd.xlane.f32.xlu0 %v187
    %v189 = vpop.xlane.xlu0 %188
    %v190 = vrcp.pop %v189
    %v191 = vmul.f32 %v189, %v190
    %v192 = vsub.f32 1.0, %v191
    %v193 = vmul.f32 %v190, %v192
    %v194 = vadd.f32 %v190, %v193
    %vm195 = vweird.f32 %v189
    %vm196 = vweird.f32 %v190
    %vm197 = vmor %vm195, %vm196
    %v198 = vsel %vm197, %v190, %v194
    %v199 = vand.u32 2147483647, %v189
    %vm200 = vcmp.eq.f32.partialorder %v199, 8.507059e+37
    %v201 = vand.u32 %v189, 2147483648
    %v202 = vor.u32 1.1754944e-38, %v201
    %v203 = vsel %vm200, %v202, %v198
    %v204 = vmul.f32 %v181, %v203
    %206 = vset.pattern.permute.xlu0 86
    %207 = vperm.xlu0 %206, %v204
    %v208 = vpop.permute.xlu0 %207
    %v210 = vmul.f32 %v208, %v63
    %211 = vset.pattern.permute.xlu0 87
    %212 = vperm.xlu0 %211, %v204
    %v213 = vpop.permute.xlu0 %212
    %v215 = vmul.f32 %v213, %v63
    %216 = vset.pattern.permute.xlu0 88
    %217 = vperm.xlu0 %216, %v204
    %v218 = vpop.permute.xlu0 %217
    %v220 = vmul.f32 %v218, %v63
    %221 = vset.pattern.permute.xlu0 89
    %222 = vperm.xlu0 %221, %v204
    %v223 = vpop.permute.xlu0 %222
    %v225 = vmul.f32 %v223, %v63
    %226 = vset.pattern.permute.xlu0 90
    %227 = vperm.xlu0 %226, %v204
    %v228 = vpop.permute.xlu0 %227
    %v230 = vmul.f32 %v228, %v63
    %232 = vrot.lane.b32.xlu0 %v215, 112
    %v233 = vpop.permute.xlu0 %232
    %v235 = vadd.f32 %v210, %v233
    %237 = vrot.lane.b32.xlu0 %v225, 112
    %v238 = vpop.permute.xlu0 %237
    %v240 = vadd.f32 %v220, %v238
    %242 = vrot.lane.b32.xlu0 %v240, 96
    %v243 = vpop.permute.xlu0 %242
    %v245 = vadd.f32 %v235, %v243
    %247 = vrot.lane.b32.xlu0 %v230, 64
    %v248 = vpop.permute.xlu0 %247
    %v250 = vadd.f32 %v245, %v248
    %252 = vrot.lane.b32.xlu0 %v174, 112
    %v253 = vpop.permute.xlu0 %252
    %256 = vrot.lane.b32.xlu0 %v250, 32
    %v257 = vpop.permute.xlu0 %256
    %vm259 = vcmask 130048
    %v260 = vsel %vm259, %v119, %v253
    %v261 = vsel %vm39, %v260, %v257
    %v262 = vld [vmem:[%s3] sm:$0xff]
    %v263 = vld [vmem:[%s3 + $0x8] sm:$0xff]
    %v264 = vld [vmem:[%s3 + $0x10] sm:$0xff]
    %v265 = vld [vmem:[%s3 + $0x18] sm:$0xff]
    %v266 = vld [vmem:[%s3 + $0x20] sm:$0xff]
    %v267 = vld [vmem:[%s3 + $0x28] sm:$0xff]
    %v268 = vld [vmem:[%s4] sm:$0x1]
    %v270 = vperm.slane %v268, 0
    %vm272 = vcmask 392192
    %v274 = vsel %vm272, %v261, 0
    %276 = vmatpush.msra.mxu0 0.0
    %277 = vmatpush.msra.mxu0 0.0
    %278 = vmatpush.msra.mxu0 0.0
    %279 = vmatpush.msra.mxu0 0.0
    %280 = vmatpush.msra.mxu0 0.0
    %281 = vmatpush.msra.mxu0 0.0
    %282 = vmatpush.msra.mxu0 0.0
    %283 = vmatpush.msra.mxu0 0.0
    %284 = vmatpush.msra.mxu0 0.0
    %285 = vmatpush.msra.mxu0 0.0
    %286 = vmatpush.msra.mxu0 %v267
    %287 = vmatpush.msra.mxu0 %v266
    %288 = vmatpush.msra.mxu0 %v265
    %289 = vmatpush.msra.mxu0 %v264
    %290 = vmatpush.msra.mxu0 %v263
    %291 = vmatpush.msra.mxu0 %v262
    %292 = vmatmul.f32.gmra.mxu0 %v274
    %v293 = vpop.f32.mrf.mxu0
    %v294 = vadd.f32 %v270, %v293
    %295 = vdwg.mxu0
    %v296 = vmax.f32 %v294, 0.0
    %v297 = vsel %vm64, %v294, -inf
    %298 = vmax.xlane.f32.xlu0 %v297
    %v299 = vpop.xlane.xlu0 %298
    %v300 = vsub.f32 %v294, %v299
    %v301 = vmul.f32 %v300, 1.442695
    %v302 = vpow.pop %v301
    %304 = vrot.lane.b32.xlu0 %v302, 48
    %v305 = vpop.permute.xlu0 %304
    %v307 = vsel %vm75, %v305, 0.0
    %308 = vadd.xlane.f32.xlu0 %v307
    %v309 = vpop.xlane.xlu0 %308
    %v310 = vrcp.pop %v309
    %v311 = vmul.f32 %v309, %v310
    %v312 = vsub.f32 1.0, %v311
    %v313 = vmul.f32 %v310, %v312
    %v314 = vadd.f32 %v310, %v313
    %vm315 = vweird.f32 %v309
    %vm316 = vweird.f32 %v310
    %vm317 = vmor %vm315, %vm316
    %v318 = vsel %vm317, %v310, %v314
    %v319 = vand.u32 2147483647, %v309
    %vm320 = vcmp.eq.f32.partialorder %v319, 8.507059e+37
    %v321 = vand.u32 %v309, 2147483648
    %v322 = vor.u32 1.1754944e-38, %v321
    %v323 = vsel %vm320, %v322, %v318
    %v324 = vmul.f32 %v302, %v323
    %326 = vset.pattern.permute.xlu0 80
    %327 = vperm.xlu0 %326, %v324
    %v328 = vpop.permute.xlu0 %327
    %v330 = vmul.f32 %v328, %v296
    %331 = vset.pattern.permute.xlu0 81
    %332 = vperm.xlu0 %331, %v324
    %v333 = vpop.permute.xlu0 %332
    %v335 = vmul.f32 %v333, %v296
    %336 = vset.pattern.permute.xlu0 82
    %337 = vperm.xlu0 %336, %v324
    %v338 = vpop.permute.xlu0 %337
    %v340 = vmul.f32 %v338, %v296
    %342 = vrot.lane.b32.xlu0 %v335, 112
    %v343 = vpop.permute.xlu0 %342
    %v345 = vadd.f32 %v330, %v343
    %347 = vrot.lane.b32.xlu0 %v340, 64
    %v348 = vpop.permute.xlu0 %347
    %v350 = vadd.f32 %v345, %v348
    %v351 = vsel %vm120, %v294, -inf
    %352 = vmax.xlane.f32.xlu0 %v351
    %v353 = vpop.xlane.xlu0 %352
    %v354 = vsub.f32 %v294, %v353
    %v355 = vmul.f32 %v354, 1.442695
    %v356 = vpow.pop %v355
    %358 = vrot.lane.b32.xlu0 %v356, 45
    %v359 = vpop.permute.xlu0 %358
    %v361 = vsel %vm75, %v359, 0.0
    %362 = vadd.xlane.f32.xlu0 %v361
    %v363 = vpop.xlane.xlu0 %362
    %v364 = vrcp.pop %v363
    %v365 = vmul.f32 %v363, %v364
    %v366 = vsub.f32 1.0, %v365
    %v367 = vmul.f32 %v364, %v366
    %v368 = vadd.f32 %v364, %v367
    %vm369 = vweird.f32 %v363
    %vm370 = vweird.f32 %v364
    %vm371 = vmor %vm369, %vm370
    %v372 = vsel %vm371, %v364, %v368
    %v373 = vand.u32 2147483647, %v363
    %vm374 = vcmp.eq.f32.partialorder %v373, 8.507059e+37
    %v375 = vand.u32 %v363, 2147483648
    %v376 = vor.u32 1.1754944e-38, %v375
    %v377 = vsel %vm374, %v376, %v372
    %v378 = vmul.f32 %v356, %v377
    %380 = vset.pattern.permute.xlu0 83
    %381 = vperm.xlu0 %380, %v378
    %v382 = vpop.permute.xlu0 %381
    %v384 = vmul.f32 %v382, %v296
    %385 = vset.pattern.permute.xlu0 84
    %386 = vperm.xlu0 %385, %v378
    %v387 = vpop.permute.xlu0 %386
    %v389 = vmul.f32 %v387, %v296
    %390 = vset.pattern.permute.xlu0 85
    %391 = vperm.xlu0 %390, %v378
    %v392 = vpop.permute.xlu0 %391
    %v394 = vmul.f32 %v392, %v296
    %396 = vrot.lane.b32.xlu0 %v389, 112
    %v397 = vpop.permute.xlu0 %396
    %v399 = vadd.f32 %v384, %v397
    %401 = vrot.lane.b32.xlu0 %v394, 96
    %v402 = vpop.permute.xlu0 %401
    %v404 = vadd.f32 %v399, %v402
    %406 = vrot.lane.b32.xlu0 %v404, 112
    %v407 = vpop.permute.xlu0 %406
    %v409 = vsel %vm259, %v350, %v407
    %v410 = vld [vmem:[%s5] sm:$0xff]
    %v411 = vld [vmem:[%s5 + $0x8] sm:$0xff]
    %v412 = vld [vmem:[%s5 + $0x10] sm:$0xff]
    %v413 = vld [vmem:[%s5 + $0x18] sm:$0xff]
    %v414 = vld [vmem:[%s6] sm:$0x1]
    %v416 = vperm.slane %v414, 0
    %v419 = vsel %vm39, %v409, 0
    %421 = vmatpush.msra.mxu0 0.0
    %422 = vmatpush.msra.mxu0 0.0
    %423 = vmatpush.msra.mxu0 0.0
    %424 = vmatpush.msra.mxu0 0.0
    %425 = vmatpush.msra.mxu0 0.0
    %426 = vmatpush.msra.mxu0 0.0
    %427 = vmatpush.msra.mxu0 0.0
    %428 = vmatpush.msra.mxu0 0.0
    %429 = vmatpush.msra.mxu0 0.0
    %430 = vmatpush.msra.mxu0 0.0
    %431 = vmatpush.msra.mxu0 0.0
    %432 = vmatpush.msra.mxu0 0.0
    %433 = vmatpush.msra.mxu0 %v413
    %434 = vmatpush.msra.mxu0 %v412
    %435 = vmatpush.msra.mxu0 %v411
    %436 = vmatpush.msra.mxu0 %v410
    %437 = vmatmul.f32.gmra.mxu0 %v419
    %v438 = vpop.f32.mrf.mxu0
    %v439 = vadd.f32 %v416, %v438
    %440 = vdwg.mxu0
    %v441 = vmax.f32 %v439, 0.0
    %v442 = vsub.f32 0.0, %v441
    %v443 = vmul.f32 %v442, 1.442695
    %v444 = vpow.pop %v443
    %v445 = vadd.f32 %v444, 1.0
    %v446 = vrcp.pop %v445
    %v447 = vmul.f32 %v445, %v446
    %v448 = vsub.f32 1.0, %v447
    %v449 = vmul.f32 %v446, %v448
    %v450 = vadd.f32 %v446, %v449
    %vm451 = vweird.f32 %v445
    %vm452 = vweird.f32 %v446
    %vm453 = vmor %vm451, %vm452
    %v454 = vsel %vm453, %v446, %v450
    %v455 = vand.u32 2147483647, %v445
    %vm456 = vcmp.eq.f32.partialorder %v455, 8.507059e+37
    %v457 = vand.u32 %v445, 2147483648
    %v458 = vor.u32 1.1754944e-38, %v457
    %v459 = vsel %vm456, %v458, %v454
    %v460 = vmul.f32 1.0, %v459
    %v461 = vld [vmem:[%s7] sm:$0x1]
    %v463 = vperm.slane %v461, 0
    %v465 = vmul.f32 %v463, %v460
    %v466 = vsub.f32 1.0, %v461
    %v468 = vperm.slane %v466, 0
    %v470 = vmul.f32 %v468, %v441
    %v471 = vadd.f32 %v465, %v470
    %472 = vst.msk [vmem:[#allocation2] sm:$0xff] %vm259, %v471
    // Predicated region
    $region34: #{_lambda_.1} parent=1 // pred_check
      _
    $region35: #{_lambda_.1} parent=1 // pred_check_branch
      %474 = sbr.rel (0) target = $region37
    $region36: #{_lambda_.1} parent=1 // pred_region
      %476 = vsyncadd [#allocation3], 0
      %s478 = sshll.u32 [#allocation2], 4
      %s479 = int_to_ptr.vmem [resolvable:$true] %s478
      %s480 = sshll.u32 %s8, 4
      %s481 = int_to_ptr.hbm [resolvable:$true] %s480
      %483 = dma.vmem_to_hbm [thread:$0]  %s479, 128, %s481, [#allocation3]
    $region37: #{_lambda_.1} parent=1 // pred_fallthru
      _
    // Predicated region
    $region38: #{_lambda_.1} parent=1 // pred_check
      _
    $region39: #{_lambda_.1} parent=1 // pred_check_branch
      %485 = sbr.rel (0) target = $region41
    $region40: #{_lambda_.1} parent=1 // pred_region
      %487 = dma.done [#allocation3], 128
    $region41: #{_lambda_.1} parent=1 // pred_fallthru
      _
    %488 = vsyncpa [#allocation3], 1

</llo_original>
